<compile_context>
chip_gen: v7x
topology: tpu7x:2x2x1
jax: 0.10.0
libtpu: 0.0.40
codegen_flags: <defaults>
</compile_context>

<pallas_src>
import jax
import jax.numpy as jnp
from jax import lax
from jax.experimental import pallas as pl
from jax.experimental.pallas import tpu as pltpu

_EPS = 1e-5
_MIB = 1024 * 1024


# --------------------------------------------------------------------------------------
# Generation-aware sizing
# --------------------------------------------------------------------------------------
def _vmem_capacity_bytes():
    """Physical VMEM per TensorCore; conservative fallback if the query is unavailable."""
    try:
        return int(pltpu.get_tpu_info().vmem_capacity_bytes)
    except Exception:
        return 64 * _MIB  # v7x per-TC size; safe lower bound across v5e/v6e/v7x


def _budgets():
    """(per-block byte budget, vmem_limit_bytes) sized from the chip's VMEM capacity.

    Pass 2 keeps ~4 double-buffered blocks live (input + output), so block_budget is
    capped at vmem/8 with headroom; 64 MiB VMEM (v7x) -> 8 MiB blocks / 48 MiB limit,
    128 MiB (v5e/v6e) -> 12 MiB blocks / 64 MiB limit.
    """
    vmem = _vmem_capacity_bytes()
    block_budget = max(2 * _MIB, min(12 * _MIB, vmem // 8))
    vmem_limit = min((vmem * 3) // 4, 4 * block_budget + 16 * _MIB)
    return block_budget, vmem_limit


def _pick_hw_tile(hw_pad, c, itemsize, budget_bytes):
    """Largest lane-dense tile (multiple of 128) dividing hw_pad whose (C, tile) block
    stays under budget_bytes.  hw_pad is always a multiple of 128 here."""
    mults = hw_pad // 128
    cap = max(1, budget_bytes // max(1, c * itemsize * 128))
    best = 1
    for m in range(1, min(mults, cap) + 1):
        if mults % m == 0:
            best = m
    return 128 * best


def _pick_chunk(hw_tile):
    """Lane chunk for the in-kernel stats reduction (keeps f32 temporaries in vregs)."""
    if hw_tile <= 2048:
        return hw_tile
    for c in (2048, 1024, 512, 256, 128):
        if hw_tile % c == 0:
            return c
    return hw_tile  # unreachable: hw_tile is a multiple of 128


# --------------------------------------------------------------------------------------
# Kernels
# --------------------------------------------------------------------------------------
def _make_stats_kernel(c, hw_tile, chunk):
    """Per-batch partial (sum, sum-of-squares) over the HW axis, chunked reduction."""
    n_chunks = hw_tile // chunk

    def kernel(x_ref, sum_ref, ssq_ref):
        j = pl.program_id(1)

        def body(i, carry):
            s, q = carry
            off = pl.multiple_of(i * chunk, chunk)
            xc = x_ref[:, pl.ds(off, chunk)].astype(jnp.float32)  # (C, chunk)
            return (s + jnp.sum(xc, axis=1, keepdims=True),
                    q + jnp.sum(xc * xc, axis=1, keepdims=True))

        init = (jnp.zeros((c, 1), jnp.float32), jnp.zeros((c, 1), jnp.float32))
        if n_chunks == 1:
            s, q = body(0, init)
        else:
            s, q = lax.fori_loop(0, n_chunks, body, init,
                                 unroll=True if n_chunks <= 8 else False)

        @pl.when(j == 0)
        def _():
            sum_ref[...] = jnp.zeros_like(sum_ref)
            ssq_ref[...] = jnp.zeros_like(ssq_ref)

        sum_ref[...] += s
        ssq_ref[...] += q

    return kernel


def _make_norm_kernel(compute_dtype):
    def kernel(x_ref, scale_ref, shift_ref, o_ref):
        x = x_ref[...].astype(compute_dtype)
        o_ref[...] = (x * scale_ref[...] + shift_ref[...]).astype(o_ref.dtype)
    return kernel


def _make_fused_kernel(inv_n, eps):
    """Single-call path when the whole activation fits in VMEM: 1 read + 1 write of x."""
    def kernel(x_ref, g_ref, b_ref, o_ref):
        x = x_ref[...].astype(jnp.float32)                 # (B, C, HW)
        s = jnp.sum(x, axis=2, keepdims=True)              # (B, C, 1) lane reduce
        q = jnp.sum(x * x, axis=2, keepdims=True)
        s = jnp.sum(s, axis=0, keepdims=True)              # (1, C, 1)
        q = jnp.sum(q, axis=0, keepdims=True)
        mean = s * inv_n
        var = jnp.maximum(q * inv_n - mean * mean, 0.0)
        inv = lax.rsqrt(var + eps)
        scale = g_ref[...] * inv                            # (1, C, 1)
        shift = b_ref[...] - mean * scale
        o_ref[...] = (x * scale + shift).astype(o_ref.dtype)
    return kernel


# --------------------------------------------------------------------------------------
# Wrapper
# --------------------------------------------------------------------------------------
def cond_instance_norm(x, gamma_all, beta_all, num_style, *, fused_bytes_limit=None):
    """Apply style `num_style`'s BatchNorm2d (training-mode batch stats) to x (NCHW)."""
    if not isinstance(num_style, int):
        # TODO(synk): list-of-styles convex combination (eval mode / running stats) not implemented.
        raise TypeError("Only the integer num_style path is implemented in the kernel.")
    num_styles = gamma_all.shape[0]
    if not 0 <= num_style < num_styles:
        raise ValueError(f'The "style number" must be between 0 and {num_styles} (excluded).')

    B, C, H, W = x.shape
    HW = H * W
    inv_n = 1.0 / (B * HW)
    x3 = x.reshape(B, C, HW)                        # free contiguous reshape (no copy)

    gamma = gamma_all[num_style].astype(jnp.float32)
    beta = beta_all[num_style].astype(jnp.float32)

    block_budget, vmem_limit = _budgets()

    # ---- Fused single-pass path (x resident in VMEM): 1 read + 1 write of x --------
    x_f32_bytes = B * C * HW * 4
    if fused_bytes_limit is None:
        fused_bytes_limit = max(0, vmem_limit - 8 * _MIB)
    if 4 * x_f32_bytes <= fused_bytes_limit:
        out = pl.pallas_call(
            _make_fused_kernel(inv_n, _EPS),
            out_shape=jax.ShapeDtypeStruct((B, C, HW), x.dtype),
            compiler_params=pltpu.CompilerParams(vmem_limit_bytes=vmem_limit),
        )(x3, gamma.reshape(1, C, 1), beta.reshape(1, C, 1))
        return out.reshape(B, C, H, W)

    # ---- Two-pass streaming path ----------------------------------------------------
    # Pad HW to a lane multiple: zero padding contributes nothing to sum/ssq (we divide
    # by the true N) and the padded output columns are sliced off afterwards.
    # TODO(synk): a masked last tile would avoid the pad/slice HBM copies entirely.
    HW_pad = ((HW + 127) // 128) * 128
    if HW_pad != HW:
        x3 = jnp.pad(x3, ((0, 0), (0, 0), (0, HW_pad - HW)))

    hw_tile = _pick_hw_tile(HW_pad, C, x.dtype.itemsize, block_budget)
    n_hw = HW_pad // hw_tile
    chunk = _pick_chunk(hw_tile)

    # Pass 1: per-batch partial stats; batch axis "parallel" so v7x megacore can shard it.
    part_sum, part_ssq = pl.pallas_call(
        _make_stats_kernel(C, hw_tile, chunk),
        out_shape=(jax.ShapeDtypeStruct((B, C, 1), jnp.float32),
                   jax.ShapeDtypeStruct((B, C, 1), jnp.float32)),
        grid=(B, n_hw),
        in_specs=[pl.BlockSpec((None, C, hw_tile), lambda b, j: (b, 0, j))],
        out_specs=(pl.BlockSpec((None, C, 1), lambda b, j: (b, 0, 0)),
                   pl.BlockSpec((None, C, 1), lambda b, j: (b, 0, 0))),
        compiler_params=pltpu.CompilerParams(
            dimension_semantics=("parallel", "arbitrary"),
            vmem_limit_bytes=vmem_limit),
    )(x3)

    # Tiny per-channel finalize (C elements) in plain JAX.
    sums = jnp.sum(part_sum[:, :, 0], axis=0)
    ssqs = jnp.sum(part_ssq[:, :, 0], axis=0)
    mean = sums * inv_n
    # TODO(synk): E[x^2]-mean^2 in a single f32 pass can cancel when |mean| >> std; a
    # per-channel pilot-mean / compensated accumulation would be more robust for bf16.
    var = jnp.maximum(ssqs * inv_n - mean * mean, 0.0)
    inv = lax.rsqrt(var + _EPS)
    scale = gamma * inv
    shift = beta - mean * scale

    compute_dtype = jnp.bfloat16 if x.dtype == jnp.bfloat16 else jnp.float32
    scale2 = scale.reshape(C, 1).astype(compute_dtype)
    shift2 = shift.reshape(C, 1).astype(compute_dtype)

    # Pass 2: streaming normalize (fully parallel, 1 mul + 1 add per element).
    out = pl.pallas_call(
        _make_norm_kernel(compute_dtype),
        out_shape=jax.ShapeDtypeStruct((B, C, HW_pad), x.dtype),
        grid=(B, n_hw),
        in_specs=[pl.BlockSpec((None, C, hw_tile), lambda b, j: (b, 0, j)),
                  pl.BlockSpec((C, 1), lambda b, j: (0, 0)),
                  pl.BlockSpec((C, 1), lambda b, j: (0, 0))],
        out_specs=pl.BlockSpec((None, C, hw_tile), lambda b, j: (b, 0, j)),
        compiler_params=pltpu.CompilerParams(
            dimension_semantics=("parallel", "parallel"),
            vmem_limit_bytes=vmem_limit),
    )(x3, scale2, shift2)

    if HW_pad != HW:
        out = out[:, :, :HW]
    return out.reshape(B, C, H, W)


# --------------------------------------------------------------------------------------
# Self-test
# --------------------------------------------------------------------------------------
if __name__ == "__main__":
    key = jax.random.PRNGKey(0)
    kx, kg, kb = jax.random.split(key, 3)

    def reference(x, gamma, beta):
        # BatchNorm2d training-mode forward: batch stats over (B, H, W), biased variance.
        mean = x.mean(axis=(0, 2, 3), keepdims=True)
        var = ((x - mean) ** 2).mean(axis=(0, 2, 3), keepdims=True)
        c = x.shape[1]
        return ((x - mean) / jnp.sqrt(var + _EPS)
                * gamma.reshape(1, c, 1, 1) + beta.reshape(1, c, 1, 1))

    num_styles = 3
    style_idx = 1

    # Case 1: small activation -> fused single-pass path.
    B, C, H, W = 2, 4, 16, 16
    x = jax.random.normal(kx, (B, C, H, W), dtype=jnp.float32)
    gamma_all = 1.0 + 0.1 * jax.random.normal(kg, (num_styles, C), dtype=jnp.float32)
    beta_all = 0.1 * jax.random.normal(kb, (num_styles, C), dtype=jnp.float32)

    out = jax.block_until_ready(cond_instance_norm(x, gamma_all, beta_all, style_idx))
    ref = reference(x, gamma_all[style_idx], beta_all[style_idx])
    assert out.shape == (B, C, H, W)
    assert jnp.allclose(out, ref, atol=1e-4, rtol=1e-4), "fused path mismatch vs reference"

    # Case 2: force the two-pass streaming path (128-aligned HW).
    out2 = jax.block_until_ready(
        cond_instance_norm(x, gamma_all, beta_all, style_idx, fused_bytes_limit=0))
    assert jnp.allclose(out2, ref, atol=1e-4, rtol=1e-4), "two-pass path mismatch vs reference"

    # Case 3: two-pass path with non-128-aligned HW (exercises lane padding).
    B2, C2, H2, W2 = 2, 8, 10, 10
    x2 = jax.random.normal(kx, (B2, C2, H2, W2), dtype=jnp.float32)
    gamma2 = 1.0 + 0.1 * jax.random.normal(kg, (num_styles, C2), dtype=jnp.float32)
    beta2 = 0.1 * jax.random.normal(kb, (num_styles, C2), dtype=jnp.float32)
    out3 = jax.block_until_ready(
        cond_instance_norm(x2, gamma2, beta2, style_idx, fused_bytes_limit=0))
    ref3 = reference(x2, gamma2[style_idx], beta2[style_idx])
    assert jnp.allclose(out3, ref3, atol=1e-4, rtol=1e-4), "padded path mismatch vs reference"

    print("KERNEL_OK")
</pallas_src>

<mosaic_0001>
module attributes {stable_mosaic.version = 11 : i64} {
  func.func @kernel(%arg0: memref<2x4x256xf32, #tpu.memory_space<vmem>>, %arg1: memref<1x4x1xf32, #tpu.memory_space<vmem>>, %arg2: memref<1x4x1xf32, #tpu.memory_space<vmem>>, %arg3: memref<2x4x256xf32, #tpu.memory_space<vmem>>) attributes {dimension_semantics = [], scalar_prefetch = 0 : i64, scratch_operands = 0 : i64, tpu.core_type = #tpu.core_type<tc>} {
    %c0 = arith.constant 0 : index
    %c0_0 = arith.constant 0 : index
    %c0_1 = arith.constant 0 : index
    %0 = vector.load %arg0[%c0, %c0_0, %c0_1] : memref<2x4x256xf32, #tpu.memory_space<vmem>>, vector<2x4x256xf32>
    %cst = arith.constant dense<0.000000e+00> : vector<2x4xf32>
    %1 = vector.multi_reduction <add>, %0, %cst [2] : vector<2x4x256xf32> to vector<2x4xf32>
    %2 = vector.shape_cast %1 : vector<2x4xf32> to vector<2x4x1xf32>
    %3 = arith.mulf %0, %0 : vector<2x4x256xf32>
    %cst_2 = arith.constant dense<0.000000e+00> : vector<2x4xf32>
    %4 = vector.multi_reduction <add>, %3, %cst_2 [2] : vector<2x4x256xf32> to vector<2x4xf32>
    %5 = vector.shape_cast %4 : vector<2x4xf32> to vector<2x4x1xf32>
    %cst_3 = arith.constant dense<0.000000e+00> : vector<4x1xf32>
    %6 = vector.multi_reduction <add>, %2, %cst_3 [0] : vector<2x4x1xf32> to vector<4x1xf32>
    %7 = vector.shape_cast %6 : vector<4x1xf32> to vector<1x4x1xf32>
    %cst_4 = arith.constant dense<0.000000e+00> : vector<4x1xf32>
    %8 = vector.multi_reduction <add>, %5, %cst_4 [0] : vector<2x4x1xf32> to vector<4x1xf32>
    %9 = vector.shape_cast %8 : vector<4x1xf32> to vector<1x4x1xf32>
    %cst_5 = arith.constant 0.001953125 : f32
    %10 = vector.broadcast %cst_5 : f32 to vector<1x4x1xf32>
    %11 = arith.mulf %7, %10 : vector<1x4x1xf32>
    %cst_6 = arith.constant 0.001953125 : f32
    %12 = vector.broadcast %cst_6 : f32 to vector<1x4x1xf32>
    %13 = arith.mulf %9, %12 : vector<1x4x1xf32>
    %14 = arith.mulf %11, %11 : vector<1x4x1xf32>
    %15 = arith.subf %13, %14 : vector<1x4x1xf32>
    %cst_7 = arith.constant 0.000000e+00 : f32
    %16 = vector.broadcast %cst_7 : f32 to vector<1x4x1xf32>
    %17 = arith.maximumf %15, %16 : vector<1x4x1xf32>
    %cst_8 = arith.constant 9.99999974E-6 : f32
    %18 = vector.broadcast %cst_8 : f32 to vector<1x4x1xf32>
    %19 = arith.addf %17, %18 : vector<1x4x1xf32>
    %20 = math.rsqrt %19 : vector<1x4x1xf32>
    %c0_9 = arith.constant 0 : index
    %c0_10 = arith.constant 0 : index
    %c0_11 = arith.constant 0 : index
    %21 = vector.load %arg1[%c0_9, %c0_10, %c0_11] : memref<1x4x1xf32, #tpu.memory_space<vmem>>, vector<1x4x1xf32>
    %22 = arith.mulf %21, %20 : vector<1x4x1xf32>
    %c0_12 = arith.constant 0 : index
    %c0_13 = arith.constant 0 : index
    %c0_14 = arith.constant 0 : index
    %23 = vector.load %arg2[%c0_12, %c0_13, %c0_14] : memref<1x4x1xf32, #tpu.memory_space<vmem>>, vector<1x4x1xf32>
    %24 = arith.mulf %11, %22 : vector<1x4x1xf32>
    %25 = arith.subf %23, %24 : vector<1x4x1xf32>
    %26 = vector.broadcast %22 : vector<1x4x1xf32> to vector<2x4x256xf32>
    %27 = arith.mulf %0, %26 : vector<2x4x256xf32>
    %28 = vector.broadcast %25 : vector<1x4x1xf32> to vector<2x4x256xf32>
    %29 = arith.addf %27, %28 : vector<2x4x256xf32>
    %c0_15 = arith.constant 0 : index
    %c0_16 = arith.constant 0 : index
    %c0_17 = arith.constant 0 : index
    %30 = vector.load %arg3[%c0_15, %c0_16, %c0_17] : memref<2x4x256xf32, #tpu.memory_space<vmem>>, vector<2x4x256xf32>
    tpu.vector_store %arg3[%c0_15, %c0_16, %c0_17], %29 {strides = array<i32>} : memref<2x4x256xf32, #tpu.memory_space<vmem>>, vector<2x4x256xf32>,
    return
  }
}

</mosaic_0001>

<llo_original>
// kernel: tpu_custom_call.1
$region0: #{tpu_custom_call.1}
  #allocation0 [shape = 'u32[]', space=smem, size = 0x4, offset = 0x4, fixed_abs, tag = 'smem constant byte address 0x4 - core index']
  #allocation1 [shape = 'u32[144,128]{1,0:T(1,128)}', space=vmem, size = 0x12000, scoped, tag = 'internal scratch']
  %s0 = inlined_call_operand.hbm [shape: f32[2,4,256], index: 0, kind: input, shape index: {}]
  %s1 = inlined_call_operand.vmem [shape: f32[1,4,1], index: 1, kind: input, shape index: {}]
  %s2 = inlined_call_operand.vmem [shape: f32[1,4,1], index: 2, kind: input, shape index: {}]
  %s3 = inlined_call_operand.hbm [shape: f32[2,4,256], index: 3, kind: output, shape index: {}]
  %s4 = sld [smem:[#allocation0]]
  $region26: #{tpu_custom_call.1} parent=0
    _
  %s6 = ssub.s32 1, %s4
  %s7 = scalar_select 0, %s6, %s4
  $region1: #{tpu_custom_call.1} parent=0
    #allocation2 [shape = 'u8[8192]{0}', space=vmem, size = 0x2000, scoped, tag = 'input window, operand 0, single buffered']
    #allocation3 [shape = 's32[1]{0}', space=sflag, size = 0x4, scoped, tag = 'scoped memory for tpu_custom_call.1']
    #allocation4 [shape = 's32[1]{0}', space=sflag, size = 0x4, scoped, tag = 'scoped memory for tpu_custom_call.1']
    #allocation5 [shape = 'u8[8192]{0}', space=vmem, size = 0x2000, scoped, tag = 'output window, operand 0, single buffered']
    %8 = vsyncpa [#allocation3], 0
    %9 = vsyncpa [#allocation4], 0
    // Predicated region
    $region2: #{tpu_custom_call.1} parent=1 // pred_check
      _
    $region3: #{tpu_custom_call.1} parent=1 // pred_check_branch
      %11 = sbr.rel (0) target = $region5
    $region4: #{tpu_custom_call.1} parent=1 // pred_region
      %s13 = ssub.s32 256, 256
      %14 = vsyncadd [#allocation3], %s13
      %s15 = sshll.u32 [#allocation2], 4
      %s16 = int_to_ptr.vmem [resolvable:$true] %s15
      %21 = dma.hbm_to_vmem [thread:$0]  %s0, 256, %s16, [#allocation3], 128, 128, 8
    $region5: #{tpu_custom_call.1} parent=1 // pred_fallthru
      _
    // Predicated region
    $region6: #{tpu_custom_call.1} parent=1 // pred_check
      _
    $region7: #{tpu_custom_call.1} parent=1 // pred_check_branch
      %23 = sbr.rel (0) target = $region9
    $region8: #{tpu_custom_call.1} parent=1 // pred_region
      _
    $region9: #{tpu_custom_call.1} parent=1 // pred_fallthru
      _
    // Predicated region
    $region10: #{tpu_custom_call.1} parent=1 // pred_check
      _
    $region11: #{tpu_custom_call.1} parent=1 // pred_check_branch
      %25 = sbr.rel (0) target = $region13
    $region12: #{tpu_custom_call.1} parent=1 // pred_region
      _
    $region13: #{tpu_custom_call.1} parent=1 // pred_fallthru
      _
    // Predicated region
    $region14: #{tpu_custom_call.1} parent=1 // pred_check
      _
    $region15: #{tpu_custom_call.1} parent=1 // pred_check_branch
      %27 = sbr.rel (0) target = $region17
    $region16: #{tpu_custom_call.1} parent=1 // pred_region
      %28 = dma.done [#allocation3], 256
    $region17: #{tpu_custom_call.1} parent=1 // pred_fallthru
      _
    %v29 = vld [vmem:[#allocation2] sm:$0xff]
    %v30 = vld [vmem:[#allocation2 + $0x8] sm:$0xff]
    %v33 = vcombine.high %v29, %v29
    %v34 = vcombine.high %v30, %v30
    %vm37 = vcmask 1043456
    %v38 = vsel %vm37, %v29, 0.0
    %v39 = vsel %vm37, %v33, 0.0
    %v40 = vadd.f32 %v38, %v39
    %41 = vadd.xlane.f32.xlu0 %v40
    %v42 = vpop.xlane.xlu0 %41
    %v43 = vsel %vm37, %v30, 0.0
    %v44 = vsel %vm37, %v34, 0.0
    %v45 = vadd.f32 %v43, %v44
    %46 = vadd.xlane.f32.xlu0 %v45
    %v47 = vpop.xlane.xlu0 %46
    %v48 = vmul.f32 %v29, %v29
    %v49 = vmul.f32 %v30, %v30
    %v52 = vcombine.high %v48, %v48
    %v53 = vcombine.high %v49, %v49
    %v56 = vsel %vm37, %v48, 0.0
    %v57 = vsel %vm37, %v52, 0.0
    %v58 = vadd.f32 %v56, %v57
    %59 = vadd.xlane.f32.xlu0 %v58
    %v60 = vpop.xlane.xlu0 %59
    %v61 = vsel %vm37, %v49, 0.0
    %v62 = vsel %vm37, %v53, 0.0
    %v63 = vadd.f32 %v61, %v62
    %64 = vadd.xlane.f32.xlu0 %v63
    %v65 = vpop.xlane.xlu0 %64
    %v66 = vsel %vm37, %v42, 0.0
    %v67 = vsel %vm37, %v47, 0.0
    %v68 = vadd.f32 %v66, %v67
    %v69 = vsel %vm37, %v60, 0.0
    %v70 = vsel %vm37, %v65, 0.0
    %v71 = vadd.f32 %v69, %v70
    %v72 = vmul.f32 %v68, 0.001953125
    %v73 = vmul.f32 %v71, 0.001953125
    %v74 = vmul.f32 %v72, %v72
    %v75 = vsub.f32 %v73, %v74
    %v76 = vmax.f32 %v75, 0.0
    %v77 = vadd.f32 %v76, 1e-05
    %v78 = vrsqrt.pop %v77
    %v79 = vld [vmem:[%s1] sm:$0xf]
    %v80 = vmul.f32 %v79, %v78
    %v81 = vld [vmem:[%s2] sm:$0xf]
    %v82 = vmul.f32 %v72, %v80
    %v83 = vsub.f32 %v81, %v82
    %85 = vset.pattern.permute.xlu0 0
    %86 = vperm.xlu0 %85, %v80
    %v87 = vpop.permute.xlu0 %86
    %v89 = vunpack.c.l.s4 839922192
    %v90 = vunpack.c.0.s8 %v89
    %v91 = vlaneseq
    %v92 = vshrl.u32 %v91, 7
    %v93 = vsub.s32 %v90, %v92
    %v94 = vrot.slane %v87, %v93
    %v96 = vmul.f32 %v29, %v94
    %v97 = vmul.f32 %v30, %v94
    %99 = vset.pattern.permute.xlu0 0
    %100 = vperm.xlu0 %99, %v83
    %v101 = vpop.permute.xlu0 %100
    %v103 = vunpack.c.l.s4 839922192
    %v104 = vunpack.c.0.s8 %v103
    %v105 = vlaneseq
    %v106 = vshrl.u32 %v105, 7
    %v107 = vsub.s32 %v104, %v106
    %v108 = vrot.slane %v101, %v107
    %v110 = vadd.f32 %v96, %v108
    %v111 = vadd.f32 %v97, %v108
    %112 = vst [vmem:[#allocation5] sm:$0xff] %v110
    %113 = vst [vmem:[#allocation5 + $0x8] sm:$0xff] %v111
    // Predicated region
    $region18: #{tpu_custom_call.1} parent=1 // pred_check
      _
    $region19: #{tpu_custom_call.1} parent=1 // pred_check_branch
      %115 = sbr.rel (0) target = $region21
    $region20: #{tpu_custom_call.1} parent=1 // pred_region
      %s117 = ssub.s32 256, 256
      %118 = vsyncadd [#allocation4], %s117
      %s119 = sshll.u32 [#allocation5], 4
      %s120 = int_to_ptr.vmem [resolvable:$true] %s119
      %125 = dma.vmem_to_hbm [thread:$0]  %s120, 256, %s3, [#allocation4], 128, 128, 8
    $region21: #{tpu_custom_call.1} parent=1 // pred_fallthru
      _
    // Predicated region
    $region22: #{tpu_custom_call.1} parent=1 // pred_check
      _
    $region23: #{tpu_custom_call.1} parent=1 // pred_check_branch
      %127 = sbr.rel (0) target = $region25
    $region24: #{tpu_custom_call.1} parent=1 // pred_region
      %128 = dma.done [#allocation4], 256
    $region25: #{tpu_custom_call.1} parent=1 // pred_fallthru
      _
    %129 = vsyncpa [#allocation3], 1
    %130 = vsyncpa [#allocation4], 1

</llo_original>
